<compile_context>
chip_gen: v5e
topology: v5e:2x2
jax: 0.10.0
libtpu: 0.0.40
codegen_flags: <defaults>
</compile_context>

<pallas_src>
import functools

import jax
import jax.numpy as jnp
from jax.experimental import pallas as pl
from jax.experimental.pallas import tpu as pltpu


def _mlp_logsoftmax_kernel(x_ref, w1_ref, b1_ref, wm_ref, bm_ref, w2_ref,
                           b2_ref, o_ref, *, num_layers, compute_dtype):
    # x_ref : (N, in_p)            w1_ref : (in_p, hid_p)     b1_ref : (1, hid_p)
    # wm_ref: (L, hid_p, hid_p)    bm_ref : (L, 1, hid_p)
    # w2_ref: (hid_p, out_p)       b2_ref : (1, out_p)        o_ref : (N, out_p)
    cd = compute_dtype

    x = x_ref[...].astype(cd)
    # Linear1: x @ W1^T + b1  (weights are already transposed in the wrapper).
    h = jnp.dot(x, w1_ref[...], preferred_element_type=jnp.float32) + b1_ref[...]

    # Hidden Linear layers (no activation, exactly as in the PyTorch module).
    if num_layers <= 4:
        for l in range(num_layers):                       # small L: unroll
            h = (jnp.dot(h.astype(cd), wm_ref[l],
                         preferred_element_type=jnp.float32) + bm_ref[l])
    else:                                                 # large L: dynamic loop
        def body(l, h):
            return (jnp.dot(h.astype(cd), wm_ref[l],
                            preferred_element_type=jnp.float32) + bm_ref[l])
        h = jax.lax.fori_loop(0, num_layers, body, h)

    # Linear2.
    logits = (jnp.dot(h.astype(cd), w2_ref[...],
                      preferred_element_type=jnp.float32) + b2_ref[...])

    # log_softmax over the N axis (== dim=1 of the (1, N, out) tensor).
    m = jnp.max(logits, axis=0, keepdims=True)
    s = logits - m
    lse = jnp.log(jnp.sum(jnp.exp(s), axis=0, keepdims=True))
    o_ref[...] = (s - lse).astype(o_ref.dtype)


def _pad_axis(x, axis, multiple):
    pad = (-x.shape[axis]) % multiple
    if pad == 0:
        return x
    widths = [(0, 0)] * x.ndim
    widths[axis] = (0, pad)
    return jnp.pad(x, widths)


def mlp_log_softmax(vec, w1, b1, wm, bm, w2, b2, *, use_bf16=False):
    """vec: (N, in_features) -> (1, N, out_features), matching Model.forward."""
    n, _ = vec.shape
    out_features, _ = w2.shape
    num_layers = wm.shape[0]

    lane = 128
    compute_dtype = jnp.bfloat16 if use_bf16 else jnp.float32

    # Pre-transpose and zero-pad feature dims to full 128-lane vregs.
    x_p = _pad_axis(vec, 1, lane)                                          # (N, in_p)
    w1_t = _pad_axis(_pad_axis(w1.T, 0, lane), 1, lane)                    # (in_p, hid_p)
    b1_p = _pad_axis(b1.reshape(1, -1), 1, lane)                           # (1, hid_p)
    wm_t = _pad_axis(_pad_axis(jnp.swapaxes(wm, 1, 2), 1, lane), 2, lane)  # (L, hid_p, hid_p)
    bm_p = _pad_axis(bm.reshape(num_layers, 1, -1), 2, lane)               # (L, 1, hid_p)
    w2_t = _pad_axis(_pad_axis(w2.T, 0, lane), 1, lane)                    # (hid_p, out_p)
    b2_p = _pad_axis(b2.reshape(1, -1), 1, lane)                           # (1, out_p)

    if use_bf16:  # bf16 matmul inputs, f32 accumulation (v6e/v7x MXU rate).
        w1_t = w1_t.astype(jnp.bfloat16)
        wm_t = wm_t.astype(jnp.bfloat16)
        w2_t = w2_t.astype(jnp.bfloat16)

    out_p = w2_t.shape[1]

    # Explicit VMEM budget (operands + output + headroom), capped for v7x 64 MiB.
    operand_bytes = sum(int(a.size) * a.dtype.itemsize
                        for a in (x_p, w1_t, b1_p, wm_t, bm_p, w2_t, b2_p))
    operand_bytes += n * out_p * 4
    vmem_limit = int(min(max(2 * operand_bytes + (1 << 20), 32 << 20), 64 << 20))

    kernel = functools.partial(_mlp_logsoftmax_kernel,
                               num_layers=num_layers,
                               compute_dtype=compute_dtype)
    vmem_spec = pl.BlockSpec(memory_space=pltpu.MemorySpace.VMEM)

    out = pl.pallas_call(
        kernel,
        out_shape=jax.ShapeDtypeStruct((n, out_p), vec.dtype),
        in_specs=[vmem_spec] * 7,
        out_specs=vmem_spec,
        compiler_params=pltpu.CompilerParams(vmem_limit_bytes=vmem_limit),
    )(x_p, w1_t, b1_p, wm_t, bm_p, w2_t, b2_p)

    # Slice off lane padding; vec.unsqueeze(0) -> leading batch dim of 1.
    return out[None, :, :out_features]


def _reference(vec, w1, b1, wm, bm, w2, b2):
    h = vec @ w1.T + b1
    for l in range(wm.shape[0]):
        h = h @ wm[l].T + bm[l]
    logits = (h @ w2.T + b2)[None, :, :]            # (1, N, out)
    return jax.nn.log_softmax(logits, axis=1)       # dim=1 == the N axis


if __name__ == "__main__":
    # Small shapes consistent with the module.
    N = 8
    in_features, hid_features, out_features = 32, 64, 16

    key = jax.random.PRNGKey(0)
    ks = jax.random.split(key, 8)

    def init_linear(kw, kb, fan_out, fan_in):
        bound = 1.0 / jnp.sqrt(fan_in)
        w = jax.random.uniform(kw, (fan_out, fan_in), jnp.float32, -bound, bound)
        b = jax.random.uniform(kb, (fan_out,), jnp.float32, -bound, bound)
        return w, b

    def make_hidden(base_key, num_layers):
        ws, bs = [], []
        for l in range(num_layers):
            kw, kb = jax.random.split(jax.random.fold_in(base_key, l))
            w, b = init_linear(kw, kb, hid_features, hid_features)
            ws.append(w)
            bs.append(b)
        return jnp.stack(ws), jnp.stack(bs)

    w1, b1 = init_linear(ks[0], ks[1], hid_features, in_features)
    w2, b2 = init_linear(ks[3], ks[4], out_features, hid_features)
    vec = jax.random.normal(ks[5], (N, in_features), jnp.float32)

    # --- Case 1: num_layers = 3 (unrolled hidden chain), f32 matmuls. ---
    wm3, bm3 = make_hidden(ks[2], 3)
    out3 = jax.block_until_ready(mlp_log_softmax(vec, w1, b1, wm3, bm3, w2, b2))
    ref3 = _reference(vec, w1, b1, wm3, bm3, w2, b2)
    assert out3.shape == (1, N, out_features), out3.shape
    assert jnp.allclose(out3, ref3, atol=1e-4, rtol=1e-4), "mismatch (L=3, f32)"

    # --- Case 2: num_layers = 6 (fori_loop hidden chain), f32 matmuls. ---
    wm6, bm6 = make_hidden(ks[6], 6)
    out6 = jax.block_until_ready(mlp_log_softmax(vec, w1, b1, wm6, bm6, w2, b2))
    ref6 = _reference(vec, w1, b1, wm6, bm6, w2, b2)
    assert jnp.allclose(out6, ref6, atol=1e-4, rtol=1e-4), "mismatch (L=6, f32)"

    # --- Case 3: bf16 matmul inputs, f32 accumulation (loose sanity check). ---
    out_bf = jax.block_until_ready(
        mlp_log_softmax(vec, w1, b1, wm3, bm3, w2, b2, use_bf16=True))
    assert jnp.allclose(out_bf, ref3, atol=1e-1, rtol=1e-1), "mismatch (bf16)"

    print("KERNEL_OK")
</pallas_src>

<mosaic_0001>
module attributes {stable_mosaic.version = 11 : i64} {
  func.func @_mlp_logsoftmax_kernel(%arg0: memref<8x128xf32, #tpu.memory_space<vmem>>, %arg1: memref<128x128xf32, #tpu.memory_space<vmem>>, %arg2: memref<1x128xf32, #tpu.memory_space<vmem>>, %arg3: memref<3x128x128xf32, #tpu.memory_space<vmem>>, %arg4: memref<3x1x128xf32, #tpu.memory_space<vmem>>, %arg5: memref<128x128xf32, #tpu.memory_space<vmem>>, %arg6: memref<1x128xf32, #tpu.memory_space<vmem>>, %arg7: memref<8x128xf32, #tpu.memory_space<vmem>>) attributes {dimension_semantics = [], scalar_prefetch = 0 : i64, scratch_operands = 0 : i64, tpu.core_type = #tpu.core_type<tc>} {
    %c0 = arith.constant 0 : index
    %c0_0 = arith.constant 0 : index
    %0 = vector.load %arg0[%c0, %c0_0] : memref<8x128xf32, #tpu.memory_space<vmem>>, vector<8x128xf32>
    %c0_1 = arith.constant 0 : index
    %c0_2 = arith.constant 0 : index
    %1 = vector.load %arg1[%c0_1, %c0_2] : memref<128x128xf32, #tpu.memory_space<vmem>>, vector<128x128xf32>
    %cst = arith.constant dense<0.000000e+00> : vector<8x128xf32>
    %2 = tpu.matmul %0, %1, %cst {dimension_numbers = #tpu.dot_dimension_numbers<[1], [0], [0], [1], [0, 0, 1, 1], [], []>} : vector<8x128xf32>, vector<128x128xf32>, vector<8x128xf32> -> vector<8x128xf32>
    %c0_3 = arith.constant 0 : index
    %c0_4 = arith.constant 0 : index
    %3 = vector.load %arg2[%c0_3, %c0_4] : memref<1x128xf32, #tpu.memory_space<vmem>>, vector<1x128xf32>
    %4 = vector.broadcast %3 : vector<1x128xf32> to vector<8x128xf32>
    %5 = arith.addf %2, %4 : vector<8x128xf32>
    %c0_5 = arith.constant 0 : index
    %c0_6 = arith.constant 0 : index
    %c0_7 = arith.constant 0 : index
    %6 = vector.load %arg3[%c0_5, %c0_6, %c0_7] : memref<3x128x128xf32, #tpu.memory_space<vmem>>, vector<1x128x128xf32>
    %7 = vector.shape_cast %6 : vector<1x128x128xf32> to vector<128x128xf32>
    %cst_8 = arith.constant dense<0.000000e+00> : vector<8x128xf32>
    %8 = tpu.matmul %5, %7, %cst_8 {dimension_numbers = #tpu.dot_dimension_numbers<[1], [0], [0], [1], [0, 0, 1, 1], [], []>} : vector<8x128xf32>, vector<128x128xf32>, vector<8x128xf32> -> vector<8x128xf32>
    %c0_9 = arith.constant 0 : index
    %c0_10 = arith.constant 0 : index
    %c0_11 = arith.constant 0 : index
    %9 = vector.load %arg4[%c0_9, %c0_10, %c0_11] : memref<3x1x128xf32, #tpu.memory_space<vmem>>, vector<1x1x128xf32>
    %10 = vector.shape_cast %9 : vector<1x1x128xf32> to vector<1x128xf32>
    %11 = vector.broadcast %10 : vector<1x128xf32> to vector<8x128xf32>
    %12 = arith.addf %8, %11 : vector<8x128xf32>
    %c1 = arith.constant 1 : index
    %c0_12 = arith.constant 0 : index
    %c0_13 = arith.constant 0 : index
    %13 = vector.load %arg3[%c1, %c0_12, %c0_13] : memref<3x128x128xf32, #tpu.memory_space<vmem>>, vector<1x128x128xf32>
    %14 = vector.shape_cast %13 : vector<1x128x128xf32> to vector<128x128xf32>
    %cst_14 = arith.constant dense<0.000000e+00> : vector<8x128xf32>
    %15 = tpu.matmul %12, %14, %cst_14 {dimension_numbers = #tpu.dot_dimension_numbers<[1], [0], [0], [1], [0, 0, 1, 1], [], []>} : vector<8x128xf32>, vector<128x128xf32>, vector<8x128xf32> -> vector<8x128xf32>
    %c1_15 = arith.constant 1 : index
    %c0_16 = arith.constant 0 : index
    %c0_17 = arith.constant 0 : index
    %16 = vector.load %arg4[%c1_15, %c0_16, %c0_17] : memref<3x1x128xf32, #tpu.memory_space<vmem>>, vector<1x1x128xf32>
    %17 = vector.shape_cast %16 : vector<1x1x128xf32> to vector<1x128xf32>
    %18 = vector.broadcast %17 : vector<1x128xf32> to vector<8x128xf32>
    %19 = arith.addf %15, %18 : vector<8x128xf32>
    %c2 = arith.constant 2 : index
    %c0_18 = arith.constant 0 : index
    %c0_19 = arith.constant 0 : index
    %20 = vector.load %arg3[%c2, %c0_18, %c0_19] : memref<3x128x128xf32, #tpu.memory_space<vmem>>, vector<1x128x128xf32>
    %21 = vector.shape_cast %20 : vector<1x128x128xf32> to vector<128x128xf32>
    %cst_20 = arith.constant dense<0.000000e+00> : vector<8x128xf32>
    %22 = tpu.matmul %19, %21, %cst_20 {dimension_numbers = #tpu.dot_dimension_numbers<[1], [0], [0], [1], [0, 0, 1, 1], [], []>} : vector<8x128xf32>, vector<128x128xf32>, vector<8x128xf32> -> vector<8x128xf32>
    %c2_21 = arith.constant 2 : index
    %c0_22 = arith.constant 0 : index
    %c0_23 = arith.constant 0 : index
    %23 = vector.load %arg4[%c2_21, %c0_22, %c0_23] : memref<3x1x128xf32, #tpu.memory_space<vmem>>, vector<1x1x128xf32>
    %24 = vector.shape_cast %23 : vector<1x1x128xf32> to vector<1x128xf32>
    %25 = vector.broadcast %24 : vector<1x128xf32> to vector<8x128xf32>
    %26 = arith.addf %22, %25 : vector<8x128xf32>
    %c0_24 = arith.constant 0 : index
    %c0_25 = arith.constant 0 : index
    %27 = vector.load %arg5[%c0_24, %c0_25] : memref<128x128xf32, #tpu.memory_space<vmem>>, vector<128x128xf32>
    %cst_26 = arith.constant dense<0.000000e+00> : vector<8x128xf32>
    %28 = tpu.matmul %26, %27, %cst_26 {dimension_numbers = #tpu.dot_dimension_numbers<[1], [0], [0], [1], [0, 0, 1, 1], [], []>} : vector<8x128xf32>, vector<128x128xf32>, vector<8x128xf32> -> vector<8x128xf32>
    %c0_27 = arith.constant 0 : index
    %c0_28 = arith.constant 0 : index
    %29 = vector.load %arg6[%c0_27, %c0_28] : memref<1x128xf32, #tpu.memory_space<vmem>>, vector<1x128xf32>
    %30 = vector.broadcast %29 : vector<1x128xf32> to vector<8x128xf32>
    %31 = arith.addf %28, %30 : vector<8x128xf32>
    %cst_29 = arith.constant dense<0xFF800000> : vector<128xf32>
    %32 = vector.multi_reduction <maximumf>, %31, %cst_29 [0] : vector<8x128xf32> to vector<128xf32>
    %33 = vector.shape_cast %32 : vector<128xf32> to vector<1x128xf32>
    %34 = vector.broadcast %33 : vector<1x128xf32> to vector<8x128xf32>
    %35 = arith.subf %31, %34 : vector<8x128xf32>
    %36 = math.exp %35 : vector<8x128xf32>
    %cst_30 = arith.constant dense<0.000000e+00> : vector<128xf32>
    %37 = vector.multi_reduction <add>, %36, %cst_30 [0] : vector<8x128xf32> to vector<128xf32>
    %38 = vector.shape_cast %37 : vector<128xf32> to vector<1x128xf32>
    %39 = math.log %38 : vector<1x128xf32>
    %40 = vector.broadcast %39 : vector<1x128xf32> to vector<8x128xf32>
    %41 = arith.subf %35, %40 : vector<8x128xf32>
    %c0_31 = arith.constant 0 : index
    %c0_32 = arith.constant 0 : index
    %42 = vector.load %arg7[%c0_31, %c0_32] : memref<8x128xf32, #tpu.memory_space<vmem>>, vector<8x128xf32>
    tpu.vector_store %arg7[%c0_31, %c0_32], %41 {strides = array<i32>} : memref<8x128xf32, #tpu.memory_space<vmem>>, vector<8x128xf32>,
    return
  }
}

</mosaic_0001>

<llo_original>
// kernel: tpu_custom_call.1
$region0: #{tpu_custom_call.1}
  #allocation0 [shape = 'u32[]', space=smem, size = 0x4, offset = 0x4, fixed_abs, tag = 'smem constant byte address 0x4 - core index']
  #allocation1 [shape = 'u32[72,128]{1,0:T(1,128)}', space=vmem, size = 0x9000, scoped, tag = 'internal scratch']
  %s0 = inlined_call_operand.hbm [shape: f32[8,128], index: 0, kind: input, shape index: {}]
  %s1 = inlined_call_operand.hbm [shape: f32[128,128], index: 1, kind: input, shape index: {}]
  %s2 = inlined_call_operand.hbm [shape: f32[1,128], index: 2, kind: input, shape index: {}]
  %s3 = inlined_call_operand.hbm [shape: f32[3,128,128], index: 3, kind: input, shape index: {}]
  %s4 = inlined_call_operand.vmem [shape: f32[3,1,128], index: 4, kind: input, shape index: {}]
  %s5 = inlined_call_operand.hbm [shape: f32[128,128], index: 5, kind: input, shape index: {}]
  %s6 = inlined_call_operand.vmem [shape: f32[1,128], index: 6, kind: input, shape index: {}]
  %s7 = inlined_call_operand.hbm [shape: f32[8,128], index: 7, kind: output, shape index: {}]
  %s8 = sld [smem:[#allocation0]]
  $region58: #{tpu_custom_call.1} parent=0
    _
  %s10 = ssub.s32 1, %s8
  %s11 = scalar_select 0, %s10, %s8
  $region1: #{tpu_custom_call.1} parent=0
    #allocation2 [shape = 'u8[4096]{0}', space=vmem, size = 0x1000, scoped, tag = 'input window, operand 0, single buffered']
    #allocation3 [shape = 's32[1]{0}', space=sflag, size = 0x4, scoped, tag = 'scoped memory for tpu_custom_call.1']
    #allocation4 [shape = 's32[1]{0}', space=sflag, size = 0x4, scoped, tag = 'scoped memory for tpu_custom_call.1']
    #allocation5 [shape = 'u8[65536]{0}', space=vmem, size = 0x10000, scoped, tag = 'input window, operand 1, single buffered']
    #allocation6 [shape = 's32[1]{0}', space=sflag, size = 0x4, scoped, tag = 'scoped memory for tpu_custom_call.1']
    #allocation7 [shape = 'u8[512]{0}', space=vmem, size = 0x400, scoped, tag = 'input window, operand 2, single buffered']
    #allocation8 [shape = 'u8[196608]{0}', space=vmem, size = 0x30000, scoped, tag = 'input window, operand 3, single buffered']
    #allocation9 [shape = 's32[1]{0}', space=sflag, size = 0x4, scoped, tag = 'scoped memory for tpu_custom_call.1']
    #allocation10 [shape = 'u8[65536]{0}', space=vmem, size = 0x10000, scoped, tag = 'input window, operand 5, single buffered']
    #allocation11 [shape = 'u8[4096]{0}', space=vmem, size = 0x1000, scoped, tag = 'output window, operand 0, single buffered']
    %12 = vsyncpa [#allocation3], 0
    %13 = vsyncpa [#allocation6], 0
    %14 = vsyncpa [#allocation9], 0
    %15 = vsyncpa [#allocation4], 0
    // Predicated region
    $region2: #{tpu_custom_call.1} parent=1 // pred_check
      _
    $region3: #{tpu_custom_call.1} parent=1 // pred_check_branch
      %17 = sbr.rel (0) target = $region5
    $region4: #{tpu_custom_call.1} parent=1 // pred_region
      %19 = vsyncadd [#allocation3], 0
      %s21 = sshll.u32 %s0, 4
      %s22 = int_to_ptr.hbm [resolvable:$true] %s21
      %s23 = sshll.u32 [#allocation2], 4
      %s24 = int_to_ptr.vmem [resolvable:$true] %s23
      %26 = dma.hbm_to_vmem [thread:$0]  %s22, 128, %s24, [#allocation3]
    $region5: #{tpu_custom_call.1} parent=1 // pred_fallthru
      _
    // Predicated region
    $region6: #{tpu_custom_call.1} parent=1 // pred_check
      _
    $region7: #{tpu_custom_call.1} parent=1 // pred_check_branch
      %28 = sbr.rel (0) target = $region9
    $region8: #{tpu_custom_call.1} parent=1 // pred_region
      %30 = vsyncadd [#allocation6], 0
      %s31 = sshll.u32 %s1, 4
      %s32 = int_to_ptr.hbm [resolvable:$true] %s31
      %s33 = sshll.u32 [#allocation5], 4
      %s34 = int_to_ptr.vmem [resolvable:$true] %s33
      %39 = dma.hbm_to_vmem [thread:$0]  %s32, 2048, %s34, [#allocation6], 128, 128, 8
    $region9: #{tpu_custom_call.1} parent=1 // pred_fallthru
      _
    // Predicated region
    $region10: #{tpu_custom_call.1} parent=1 // pred_check
      _
    $region11: #{tpu_custom_call.1} parent=1 // pred_check_branch
      %41 = sbr.rel (0) target = $region13
    $region12: #{tpu_custom_call.1} parent=1 // pred_region
      %43 = vsyncadd [#allocation6], 0
      %s45 = sshll.u32 %s2, 4
      %s46 = int_to_ptr.hbm [resolvable:$true] %s45
      %s47 = sshll.u32 [#allocation7], 4
      %s48 = int_to_ptr.vmem [resolvable:$true] %s47
      %50 = dma.hbm_to_vmem [thread:$0]  %s46, 16, %s48, [#allocation6]
    $region13: #{tpu_custom_call.1} parent=1 // pred_fallthru
      _
    // Predicated region
    $region14: #{tpu_custom_call.1} parent=1 // pred_check
      _
    $region15: #{tpu_custom_call.1} parent=1 // pred_check_branch
      %52 = sbr.rel (0) target = $region17
    $region16: #{tpu_custom_call.1} parent=1 // pred_region
      %54 = vsyncadd [#allocation9], 0
      %s55 = sshll.u32 %s3, 4
      %s56 = int_to_ptr.hbm [resolvable:$true] %s55
      %s57 = sshll.u32 [#allocation8], 4
      %s58 = int_to_ptr.vmem [resolvable:$true] %s57
      %63 = dma.hbm_to_vmem [thread:$0]  %s56, 6144, %s58, [#allocation9], 128, 128, 8
    $region17: #{tpu_custom_call.1} parent=1 // pred_fallthru
      _
    // Predicated region
    $region18: #{tpu_custom_call.1} parent=1 // pred_check
      _
    $region19: #{tpu_custom_call.1} parent=1 // pred_check_branch
      %65 = sbr.rel (0) target = $region21
    $region20: #{tpu_custom_call.1} parent=1 // pred_region
      _
    $region21: #{tpu_custom_call.1} parent=1 // pred_fallthru
      _
    // Predicated region
    $region22: #{tpu_custom_call.1} parent=1 // pred_check
      _
    $region23: #{tpu_custom_call.1} parent=1 // pred_check_branch
      %67 = sbr.rel (0) target = $region25
    $region24: #{tpu_custom_call.1} parent=1 // pred_region
      %69 = vsyncadd [#allocation9], 0
      %s70 = sshll.u32 %s5, 4
      %s71 = int_to_ptr.hbm [resolvable:$true] %s70
      %s72 = sshll.u32 [#allocation10], 4
      %s73 = int_to_ptr.vmem [resolvable:$true] %s72
      %78 = dma.hbm_to_vmem [thread:$0]  %s71, 2048, %s73, [#allocation9], 128, 128, 8
    $region25: #{tpu_custom_call.1} parent=1 // pred_fallthru
      _
    // Predicated region
    $region26: #{tpu_custom_call.1} parent=1 // pred_check
      _
    $region27: #{tpu_custom_call.1} parent=1 // pred_check_branch
      %80 = sbr.rel (0) target = $region29
    $region28: #{tpu_custom_call.1} parent=1 // pred_region
      _
    $region29: #{tpu_custom_call.1} parent=1 // pred_fallthru
      _
    // Predicated region
    $region30: #{tpu_custom_call.1} parent=1 // pred_check
      _
    $region31: #{tpu_custom_call.1} parent=1 // pred_check_branch
      %82 = sbr.rel (0) target = $region33
    $region32: #{tpu_custom_call.1} parent=1 // pred_region
      %84 = dma.done [#allocation3], 128
    $region33: #{tpu_custom_call.1} parent=1 // pred_fallthru
      _
    // Predicated region
    $region34: #{tpu_custom_call.1} parent=1 // pred_check
      _
    $region35: #{tpu_custom_call.1} parent=1 // pred_check_branch
      %86 = sbr.rel (0) target = $region37
    $region36: #{tpu_custom_call.1} parent=1 // pred_region
      %88 = dma.done [#allocation6], 2048
    $region37: #{tpu_custom_call.1} parent=1 // pred_fallthru
      _
    // Predicated region
    $region38: #{tpu_custom_call.1} parent=1 // pred_check
      _
    $region39: #{tpu_custom_call.1} parent=1 // pred_check_branch
      %90 = sbr.rel (0) target = $region41
    $region40: #{tpu_custom_call.1} parent=1 // pred_region
      %92 = dma.done [#allocation6], 16
    $region41: #{tpu_custom_call.1} parent=1 // pred_fallthru
      _
    // Predicated region
    $region42: #{tpu_custom_call.1} parent=1 // pred_check
      _
    $region43: #{tpu_custom_call.1} parent=1 // pred_check_branch
      %94 = sbr.rel (0) target = $region45
    $region44: #{tpu_custom_call.1} parent=1 // pred_region
      %96 = dma.done [#allocation9], 6144
    $region45: #{tpu_custom_call.1} parent=1 // pred_fallthru
      _
    // Predicated region
    $region46: #{tpu_custom_call.1} parent=1 // pred_check
      _
    $region47: #{tpu_custom_call.1} parent=1 // pred_check_branch
      %98 = sbr.rel (0) target = $region49
    $region48: #{tpu_custom_call.1} parent=1 // pred_region
      %100 = dma.done [#allocation9], 2048
    $region49: #{tpu_custom_call.1} parent=1 // pred_fallthru
      _
    %v101 = vld [vmem:[#allocation2] sm:$0xff]
    %v102 = vld [vmem:[#allocation5] sm:$0xff]
    %v103 = vld [vmem:[#allocation5 + $0x8] sm:$0xff]
    %v104 = vld [vmem:[#allocation5 + $0x10] sm:$0xff]
    %v105 = vld [vmem:[#allocation5 + $0x18] sm:$0xff]
    %v106 = vld [vmem:[#allocation5 + $0x20] sm:$0xff]
    %v107 = vld [vmem:[#allocation5 + $0x28] sm:$0xff]
    %v108 = vld [vmem:[#allocation5 + $0x30] sm:$0xff]
    %v109 = vld [vmem:[#allocation5 + $0x38] sm:$0xff]
    %v110 = vld [vmem:[#allocation5 + $0x40] sm:$0xff]
    %v111 = vld [vmem:[#allocation5 + $0x48] sm:$0xff]
    %v112 = vld [vmem:[#allocation5 + $0x50] sm:$0xff]
    %v113 = vld [vmem:[#allocation5 + $0x58] sm:$0xff]
    %v114 = vld [vmem:[#allocation5 + $0x60] sm:$0xff]
    %v115 = vld [vmem:[#allocation5 + $0x68] sm:$0xff]
    %v116 = vld [vmem:[#allocation5 + $0x70] sm:$0xff]
    %v117 = vld [vmem:[#allocation5 + $0x78] sm:$0xff]
    %v118 = vld [vmem:[#allocation7] sm:$0x1]
    %v120 = vperm.slane %v118, 0
    %122 = vmatpush.msra.mxu0 %v117
    %123 = vmatpush.msra.mxu0 %v116
    %124 = vmatpush.msra.mxu0 %v115
    %125 = vmatpush.msra.mxu0 %v114
    %126 = vmatpush.msra.mxu0 %v113
    %127 = vmatpush.msra.mxu0 %v112
    %128 = vmatpush.msra.mxu0 %v111
    %129 = vmatpush.msra.mxu0 %v110
    %130 = vmatpush.msra.mxu0 %v109
    %131 = vmatpush.msra.mxu0 %v108
    %132 = vmatpush.msra.mxu0 %v107
    %133 = vmatpush.msra.mxu0 %v106
    %134 = vmatpush.msra.mxu0 %v105
    %135 = vmatpush.msra.mxu0 %v104
    %136 = vmatpush.msra.mxu0 %v103
    %137 = vmatpush.msra.mxu0 %v102
    %138 = vmatmul.f32.gmra.mxu0 %v101
    %v139 = vpop.f32.mrf.mxu0
    %v140 = vadd.f32 %v120, %v139
    %141 = vdwg.mxu0
    %v142 = vld [vmem:[#allocation8] sm:$0xff]
    %v143 = vld [vmem:[#allocation8 + $0x8] sm:$0xff]
    %v144 = vld [vmem:[#allocation8 + $0x10] sm:$0xff]
    %v145 = vld [vmem:[#allocation8 + $0x18] sm:$0xff]
    %v146 = vld [vmem:[#allocation8 + $0x20] sm:$0xff]
    %v147 = vld [vmem:[#allocation8 + $0x28] sm:$0xff]
    %v148 = vld [vmem:[#allocation8 + $0x30] sm:$0xff]
    %v149 = vld [vmem:[#allocation8 + $0x38] sm:$0xff]
    %v150 = vld [vmem:[#allocation8 + $0x40] sm:$0xff]
    %v151 = vld [vmem:[#allocation8 + $0x48] sm:$0xff]
    %v152 = vld [vmem:[#allocation8 + $0x50] sm:$0xff]
    %v153 = vld [vmem:[#allocation8 + $0x58] sm:$0xff]
    %v154 = vld [vmem:[#allocation8 + $0x60] sm:$0xff]
    %v155 = vld [vmem:[#allocation8 + $0x68] sm:$0xff]
    %v156 = vld [vmem:[#allocation8 + $0x70] sm:$0xff]
    %v157 = vld [vmem:[#allocation8 + $0x78] sm:$0xff]
    %v158 = vld [vmem:[%s4] sm:$0x1]
    %v160 = vperm.slane %v158, 0
    %162 = vmatpush.msra.mxu0 %v157
    %163 = vmatpush.msra.mxu0 %v156
    %164 = vmatpush.msra.mxu0 %v155
    %165 = vmatpush.msra.mxu0 %v154
    %166 = vmatpush.msra.mxu0 %v153
    %167 = vmatpush.msra.mxu0 %v152
    %168 = vmatpush.msra.mxu0 %v151
    %169 = vmatpush.msra.mxu0 %v150
    %170 = vmatpush.msra.mxu0 %v149
    %171 = vmatpush.msra.mxu0 %v148
    %172 = vmatpush.msra.mxu0 %v147
    %173 = vmatpush.msra.mxu0 %v146
    %174 = vmatpush.msra.mxu0 %v145
    %175 = vmatpush.msra.mxu0 %v144
    %176 = vmatpush.msra.mxu0 %v143
    %177 = vmatpush.msra.mxu0 %v142
    %178 = vmatmul.f32.gmra.mxu0 %v140
    %v179 = vpop.f32.mrf.mxu0
    %v180 = vadd.f32 %v160, %v179
    %181 = vdwg.mxu0
    %s182 = scalar_lea.vmem [#allocation8], 128
    %v183 = vld [vmem:[%s182] sm:$0xff]
    %v184 = vld [vmem:[%s182 + $0x8] sm:$0xff]
    %v185 = vld [vmem:[%s182 + $0x10] sm:$0xff]
    %v186 = vld [vmem:[%s182 + $0x18] sm:$0xff]
    %v187 = vld [vmem:[%s182 + $0x20] sm:$0xff]
    %v188 = vld [vmem:[%s182 + $0x28] sm:$0xff]
    %v189 = vld [vmem:[%s182 + $0x30] sm:$0xff]
    %v190 = vld [vmem:[%s182 + $0x38] sm:$0xff]
    %v191 = vld [vmem:[%s182 + $0x40] sm:$0xff]
    %v192 = vld [vmem:[%s182 + $0x48] sm:$0xff]
    %v193 = vld [vmem:[%s182 + $0x50] sm:$0xff]
    %v194 = vld [vmem:[%s182 + $0x58] sm:$0xff]
    %v195 = vld [vmem:[%s182 + $0x60] sm:$0xff]
    %v196 = vld [vmem:[%s182 + $0x68] sm:$0xff]
    %v197 = vld [vmem:[%s182 + $0x70] sm:$0xff]
    %v198 = vld [vmem:[%s182 + $0x78] sm:$0xff]
    %s199 = scalar_lea.vmem %s4, 1
    %v200 = vld [vmem:[%s199] sm:$0x1]
    %v202 = vperm.slane %v200, 0
    %204 = vmatpush.msra.mxu0 %v198
    %205 = vmatpush.msra.mxu0 %v197
    %206 = vmatpush.msra.mxu0 %v196
    %207 = vmatpush.msra.mxu0 %v195
    %208 = vmatpush.msra.mxu0 %v194
    %209 = vmatpush.msra.mxu0 %v193
    %210 = vmatpush.msra.mxu0 %v192
    %211 = vmatpush.msra.mxu0 %v191
    %212 = vmatpush.msra.mxu0 %v190
    %213 = vmatpush.msra.mxu0 %v189
    %214 = vmatpush.msra.mxu0 %v188
    %215 = vmatpush.msra.mxu0 %v187
    %216 = vmatpush.msra.mxu0 %v186
    %217 = vmatpush.msra.mxu0 %v185
    %218 = vmatpush.msra.mxu0 %v184
    %219 = vmatpush.msra.mxu0 %v183
    %220 = vmatmul.f32.gmra.mxu0 %v180
    %v221 = vpop.f32.mrf.mxu0
    %v222 = vadd.f32 %v202, %v221
    %223 = vdwg.mxu0
    %s224 = scalar_lea.vmem [#allocation8], 256
    %v225 = vld [vmem:[%s224] sm:$0xff]
    %v226 = vld [vmem:[%s224 + $0x8] sm:$0xff]
    %v227 = vld [vmem:[%s224 + $0x10] sm:$0xff]
    %v228 = vld [vmem:[%s224 + $0x18] sm:$0xff]
    %v229 = vld [vmem:[%s224 + $0x20] sm:$0xff]
    %v230 = vld [vmem:[%s224 + $0x28] sm:$0xff]
    %v231 = vld [vmem:[%s224 + $0x30] sm:$0xff]
    %v232 = vld [vmem:[%s224 + $0x38] sm:$0xff]
    %v233 = vld [vmem:[%s224 + $0x40] sm:$0xff]
    %v234 = vld [vmem:[%s224 + $0x48] sm:$0xff]
    %v235 = vld [vmem:[%s224 + $0x50] sm:$0xff]
    %v236 = vld [vmem:[%s224 + $0x58] sm:$0xff]
    %v237 = vld [vmem:[%s224 + $0x60] sm:$0xff]
    %v238 = vld [vmem:[%s224 + $0x68] sm:$0xff]
    %v239 = vld [vmem:[%s224 + $0x70] sm:$0xff]
    %v240 = vld [vmem:[%s224 + $0x78] sm:$0xff]
    %s241 = scalar_lea.vmem %s4, 2
    %v242 = vld [vmem:[%s241] sm:$0x1]
    %v244 = vperm.slane %v242, 0
    %246 = vmatpush.msra.mxu0 %v240
    %247 = vmatpush.msra.mxu0 %v239
    %248 = vmatpush.msra.mxu0 %v238
    %249 = vmatpush.msra.mxu0 %v237
    %250 = vmatpush.msra.mxu0 %v236
    %251 = vmatpush.msra.mxu0 %v235
    %252 = vmatpush.msra.mxu0 %v234
    %253 = vmatpush.msra.mxu0 %v233
    %254 = vmatpush.msra.mxu0 %v232
    %255 = vmatpush.msra.mxu0 %v231
    %256 = vmatpush.msra.mxu0 %v230
    %257 = vmatpush.msra.mxu0 %v229
    %258 = vmatpush.msra.mxu0 %v228
    %259 = vmatpush.msra.mxu0 %v227
    %260 = vmatpush.msra.mxu0 %v226
    %261 = vmatpush.msra.mxu0 %v225
    %262 = vmatmul.f32.gmra.mxu0 %v222
    %v263 = vpop.f32.mrf.mxu0
    %v264 = vadd.f32 %v244, %v263
    %265 = vdwg.mxu0
    %v266 = vld [vmem:[#allocation10] sm:$0xff]
    %v267 = vld [vmem:[#allocation10 + $0x8] sm:$0xff]
    %v268 = vld [vmem:[#allocation10 + $0x10] sm:$0xff]
    %v269 = vld [vmem:[#allocation10 + $0x18] sm:$0xff]
    %v270 = vld [vmem:[#allocation10 + $0x20] sm:$0xff]
    %v271 = vld [vmem:[#allocation10 + $0x28] sm:$0xff]
    %v272 = vld [vmem:[#allocation10 + $0x30] sm:$0xff]
    %v273 = vld [vmem:[#allocation10 + $0x38] sm:$0xff]
    %v274 = vld [vmem:[#allocation10 + $0x40] sm:$0xff]
    %v275 = vld [vmem:[#allocation10 + $0x48] sm:$0xff]
    %v276 = vld [vmem:[#allocation10 + $0x50] sm:$0xff]
    %v277 = vld [vmem:[#allocation10 + $0x58] sm:$0xff]
    %v278 = vld [vmem:[#allocation10 + $0x60] sm:$0xff]
    %v279 = vld [vmem:[#allocation10 + $0x68] sm:$0xff]
    %v280 = vld [vmem:[#allocation10 + $0x70] sm:$0xff]
    %v281 = vld [vmem:[#allocation10 + $0x78] sm:$0xff]
    %v282 = vld [vmem:[%s6] sm:$0x1]
    %v284 = vperm.slane %v282, 0
    %286 = vmatpush.msra.mxu0 %v281
    %287 = vmatpush.msra.mxu0 %v280
    %288 = vmatpush.msra.mxu0 %v279
    %289 = vmatpush.msra.mxu0 %v278
    %290 = vmatpush.msra.mxu0 %v277
    %291 = vmatpush.msra.mxu0 %v276
    %292 = vmatpush.msra.mxu0 %v275
    %293 = vmatpush.msra.mxu0 %v274
    %294 = vmatpush.msra.mxu0 %v273
    %295 = vmatpush.msra.mxu0 %v272
    %296 = vmatpush.msra.mxu0 %v271
    %297 = vmatpush.msra.mxu0 %v270
    %298 = vmatpush.msra.mxu0 %v269
    %299 = vmatpush.msra.mxu0 %v268
    %300 = vmatpush.msra.mxu0 %v267
    %301 = vmatpush.msra.mxu0 %v266
    %302 = vmatmul.f32.gmra.mxu0 %v264
    %v303 = vpop.f32.mrf.mxu0
    %v304 = vadd.f32 %v284, %v303
    %305 = vdwg.mxu0
    %v306 = vrot.slane %v304, 4
    %v307 = vmax.f32 %v304, %v306
    %v308 = vrot.slane %v307, 2
    %v309 = vmax.f32 %v307, %v308
    %v310 = vrot.slane %v309, 1
    %v311 = vmax.f32 %v309, %v310
    %v312 = vsub.f32 %v304, %v311
    %v313 = vmul.f32 %v312, 1.442695
    %v314 = vpow.pop %v313
    %v315 = vrot.slane %v314, 4
    %v316 = vadd.f32 %v314, %v315
    %v317 = vrot.slane %v316, 2
    %v318 = vadd.f32 %v316, %v317
    %v319 = vrot.slane %v318, 1
    %v320 = vadd.f32 %v318, %v319
    %v321 = vlog2.pop %v320
    %v322 = vmul.f32 %v321, 0.6931472
    %v323 = vsub.f32 %v312, %v322
    %324 = vst [vmem:[#allocation11] sm:$0xff] %v323
    // Predicated region
    $region50: #{tpu_custom_call.1} parent=1 // pred_check
      _
    $region51: #{tpu_custom_call.1} parent=1 // pred_check_branch
      %326 = sbr.rel (0) target = $region53
    $region52: #{tpu_custom_call.1} parent=1 // pred_region
      %328 = vsyncadd [#allocation4], 0
      %s330 = sshll.u32 [#allocation11], 4
      %s331 = int_to_ptr.vmem [resolvable:$true] %s330
      %s332 = sshll.u32 %s7, 4
      %s333 = int_to_ptr.hbm [resolvable:$true] %s332
      %335 = dma.vmem_to_hbm [thread:$0]  %s331, 128, %s333, [#allocation4]
    $region53: #{tpu_custom_call.1} parent=1 // pred_fallthru
      _
    // Predicated region
    $region54: #{tpu_custom_call.1} parent=1 // pred_check
      _
    $region55: #{tpu_custom_call.1} parent=1 // pred_check_branch
      %337 = sbr.rel (0) target = $region57
    $region56: #{tpu_custom_call.1} parent=1 // pred_region
      %339 = dma.done [#allocation4], 128
    $region57: #{tpu_custom_call.1} parent=1 // pred_fallthru
      _
    %340 = vsyncpa [#allocation3], 1
    %341 = vsyncpa [#allocation6], 1
    %342 = vsyncpa [#allocation9], 1
    %343 = vsyncpa [#allocation4], 1

</llo_original>
